<compile_context>
chip_gen: v6e
topology: v6e:2x2x1
jax: 0.10.0
libtpu: 0.0.40
codegen_flags: <defaults>
</compile_context>

<pallas_src>
import jax
import jax.numpy as jnp
import numpy as np
from jax import lax
from jax.experimental import pallas as pl
from jax.experimental.pallas import tpu as pltpu


def lstm_kernel(x_ref, wih_ref, whh_ref, b_ref, wl_ref, bl_ref, out_ref, xg_ref):
    # x_ref:  (T*B, I)   flattened time-major input
    # xg_ref: (T*B, 4H)  VMEM scratch holding all input-gate pre-activations
    # out_ref: (1, B, O)
    B = out_ref.shape[1]
    H = whh_ref.shape[0]
    T = x_ref.shape[0] // B

    # --- Hoisted input projection: one matmul for all T time steps (no recurrence dep). ---
    xg_ref[...] = (
        jnp.dot(x_ref[...], wih_ref[...], preferred_element_type=jnp.float32)
        + b_ref[...]
    )

    whh = whh_ref[...]  # keep the recurrent weight resident in vregs across the loop

    def step(t, carry):
        h, c = carry
        # gates: (B, 4H) — precomputed input term + recurrent term
        gates = xg_ref[pl.ds(t * B, B), :] + jnp.dot(
            h, whh, preferred_element_type=jnp.float32
        )
        # Full-vreg nonlinearities (4H = 128 lanes = one full lane width), slice after.
        sig_all = jax.nn.sigmoid(gates)
        tanh_all = jnp.tanh(gates)
        i_g = sig_all[:, 0 * H:1 * H]
        f_g = sig_all[:, 1 * H:2 * H]
        g_g = tanh_all[:, 2 * H:3 * H]
        o_g = sig_all[:, 3 * H:4 * H]

        c_new = f_g * c + i_g * g_g
        h_new = o_g * jnp.tanh(c_new)
        return h_new, c_new

    h0 = jnp.zeros((B, H), jnp.float32)
    c0 = jnp.zeros((B, H), jnp.float32)
    h, _ = lax.fori_loop(0, T, step, (h0, c0), unroll=True)

    # Final hidden -> linear projection, shaped like PyTorch's linear(hidden): (1, B, O)
    y = jnp.dot(h, wl_ref[...], preferred_element_type=jnp.float32) + bl_ref[...]
    out_ref[...] = y[None, :, :].astype(out_ref.dtype)


def lstm_forward(x, w_ih, w_hh, bias, w_lin, b_lin):
    """x: (B, T, I) batch_first. Returns (1, B, O), matching the PyTorch module forward."""
    B, T, I = x.shape
    H = w_hh.shape[0]
    O = w_lin.shape[1]

    # (B, T, I) -> (T, B, I) -> (T*B, I): row t*B + b is time step t, batch element b.
    x_flat = jnp.transpose(x, (1, 0, 2)).reshape(T * B, I)

    return pl.pallas_call(
        lstm_kernel,
        out_shape=jax.ShapeDtypeStruct((1, B, O), jnp.float32),
        # Single invocation (no grid): every operand is DMA'd into VMEM once, whole-array.
        in_specs=[pl.BlockSpec(memory_space=pltpu.MemorySpace.VMEM)] * 6,
        out_specs=pl.BlockSpec(memory_space=pltpu.MemorySpace.VMEM),
        scratch_shapes=[
            pltpu.VMEM((T * B, 4 * H), jnp.float32),  # all input-gate pre-activations
        ],
    )(x_flat, w_ih, w_hh, bias, w_lin, b_lin)


def ref_forward(x, w_ih, w_hh, bias, w_lin, b_lin):
    """Pure-JAX reference of the PyTorch forward semantics."""
    B, T, I = x.shape
    H = w_hh.shape[0]
    h = jnp.zeros((B, H), jnp.float32)
    c = jnp.zeros((B, H), jnp.float32)
    for t in range(T):
        gates = x[:, t] @ w_ih + h @ w_hh + bias
        i_g = jax.nn.sigmoid(gates[:, 0 * H:1 * H])
        f_g = jax.nn.sigmoid(gates[:, 1 * H:2 * H])
        g_g = jnp.tanh(gates[:, 2 * H:3 * H])
        o_g = jax.nn.sigmoid(gates[:, 3 * H:4 * H])
        c = f_g * c + i_g * g_g
        h = o_g * jnp.tanh(c)
    return (h @ w_lin + b_lin)[None, :, :]


if __name__ == "__main__":
    # Module hyperparameters (from __init__ defaults)
    INPUT_SIZE = 8
    HIDDEN = 32
    OUTPUT = 1
    B, T = 2, 8

    key = jax.random.PRNGKey(0)
    kx, k1, k2, k3, k4, k5, k6 = jax.random.split(key, 7)

    # Input: (B, T, input_size) since batch_first=True
    x = jax.random.normal(kx, (B, T, INPUT_SIZE), dtype=jnp.float32)

    # Deterministic parameter init mimicking PyTorch's uniform(-1/sqrt(H), 1/sqrt(H)).
    bound = 1.0 / np.sqrt(HIDDEN)
    # Stored already transposed for right-multiplication; gate order [i, f, g, o].
    w_ih = jax.random.uniform(k1, (INPUT_SIZE, 4 * HIDDEN), jnp.float32, -bound, bound)
    w_hh = jax.random.uniform(k2, (HIDDEN, 4 * HIDDEN), jnp.float32, -bound, bound)
    b_ih = jax.random.uniform(k3, (1, 4 * HIDDEN), jnp.float32, -bound, bound)
    b_hh = jax.random.uniform(k4, (1, 4 * HIDDEN), jnp.float32, -bound, bound)
    bias = b_ih + b_hh  # PyTorch adds both biases; fold into one
    w_lin = jax.random.uniform(k5, (HIDDEN, OUTPUT), jnp.float32, -bound, bound)
    b_lin = jax.random.uniform(k6, (1, OUTPUT), jnp.float32, -bound, bound)

    out = lstm_forward(x, w_ih, w_hh, bias, w_lin, b_lin)
    out = jax.block_until_ready(out)

    ref = ref_forward(x, w_ih, w_hh, bias, w_lin, b_lin)
    assert out.shape == (1, B, OUTPUT), out.shape
    np.testing.assert_allclose(np.asarray(out), np.asarray(ref), rtol=1e-5, atol=1e-5)

    print("KERNEL_OK")
</pallas_src>

<mosaic_0001>
module attributes {stable_mosaic.version = 11 : i64} {
  func.func @lstm_kernel(%arg0: memref<16x8xf32, #tpu.memory_space<vmem>>, %arg1: memref<8x128xf32, #tpu.memory_space<vmem>>, %arg2: memref<32x128xf32, #tpu.memory_space<vmem>>, %arg3: memref<1x128xf32, #tpu.memory_space<vmem>>, %arg4: memref<32x1xf32, #tpu.memory_space<vmem>>, %arg5: memref<1x1xf32, #tpu.memory_space<vmem>>, %arg6: memref<1x2x1xf32, #tpu.memory_space<vmem>>, %arg7: memref<16x128xf32, #tpu.memory_space<vmem>>) attributes {dimension_semantics = [], scalar_prefetch = 0 : i64, scratch_operands = 1 : i64, tpu.core_type = #tpu.core_type<tc>} {
    %c0 = arith.constant 0 : index
    %c0_0 = arith.constant 0 : index
    %0 = vector.load %arg0[%c0, %c0_0] : memref<16x8xf32, #tpu.memory_space<vmem>>, vector<16x8xf32>
    %c0_1 = arith.constant 0 : index
    %c0_2 = arith.constant 0 : index
    %1 = vector.load %arg1[%c0_1, %c0_2] : memref<8x128xf32, #tpu.memory_space<vmem>>, vector<8x128xf32>
    %cst = arith.constant dense<0.000000e+00> : vector<16x128xf32>
    %2 = tpu.matmul %0, %1, %cst {dimension_numbers = #tpu.dot_dimension_numbers<[1], [0], [0], [1], [0, 0, 1, 1], [], []>} : vector<16x8xf32>, vector<8x128xf32>, vector<16x128xf32> -> vector<16x128xf32>
    %c0_3 = arith.constant 0 : index
    %c0_4 = arith.constant 0 : index
    %3 = vector.load %arg3[%c0_3, %c0_4] : memref<1x128xf32, #tpu.memory_space<vmem>>, vector<1x128xf32>
    %4 = vector.broadcast %3 : vector<1x128xf32> to vector<16x128xf32>
    %5 = arith.addf %2, %4 : vector<16x128xf32>
    %c0_5 = arith.constant 0 : index
    %c0_6 = arith.constant 0 : index
    %6 = vector.load %arg7[%c0_5, %c0_6] : memref<16x128xf32, #tpu.memory_space<vmem>>, vector<16x128xf32>
    tpu.vector_store %arg7[%c0_5, %c0_6], %5 {strides = array<i32>} : memref<16x128xf32, #tpu.memory_space<vmem>>, vector<16x128xf32>,
    %c0_7 = arith.constant 0 : index
    %c0_8 = arith.constant 0 : index
    %7 = vector.load %arg2[%c0_7, %c0_8] : memref<32x128xf32, #tpu.memory_space<vmem>>, vector<32x128xf32>
    %cst_9 = arith.constant 0.000000e+00 : f32
    %8 = vector.broadcast %cst_9 : f32 to vector<2x32xf32>
    %cst_10 = arith.constant 0.000000e+00 : f32
    %9 = vector.broadcast %cst_10 : f32 to vector<2x32xf32>
    %c0_i32 = arith.constant 0 : i32
    %c2_i32 = arith.constant 2 : i32
    %10 = arith.muli %c0_i32, %c2_i32 : i32
    %11 = arith.index_cast %10 : i32 to index
    %c0_11 = arith.constant 0 : index
    %12 = vector.load %arg7[%11, %c0_11] : memref<16x128xf32, #tpu.memory_space<vmem>>, vector<2x128xf32>
    %cst_12 = arith.constant dense<0.000000e+00> : vector<2x128xf32>
    %13 = tpu.matmul %8, %7, %cst_12 {dimension_numbers = #tpu.dot_dimension_numbers<[1], [0], [0], [1], [0, 0, 1, 1], [], []>} : vector<2x32xf32>, vector<32x128xf32>, vector<2x128xf32> -> vector<2x128xf32>
    %14 = arith.addf %12, %13 : vector<2x128xf32>
    %15 = arith.negf %14 : vector<2x128xf32>
    %16 = math.exp %15 : vector<2x128xf32>
    %cst_13 = arith.constant 1.000000e+00 : f32
    %17 = vector.broadcast %cst_13 : f32 to vector<2x128xf32>
    %18 = arith.addf %17, %16 : vector<2x128xf32>
    %19 = arith.divf %17, %18 : vector<2x128xf32>
    %20 = math.tanh %14 : vector<2x128xf32>
    %21 = vector.extract_strided_slice %19 {offsets = [0, 0], sizes = [2, 32], strides = [1, 1]} : vector<2x128xf32> to vector<2x32xf32>
    %22 = vector.extract_strided_slice %19 {offsets = [0, 32], sizes = [2, 32], strides = [1, 1]} : vector<2x128xf32> to vector<2x32xf32>
    %23 = vector.extract_strided_slice %20 {offsets = [0, 64], sizes = [2, 32], strides = [1, 1]} : vector<2x128xf32> to vector<2x32xf32>
    %24 = vector.extract_strided_slice %19 {offsets = [0, 96], sizes = [2, 32], strides = [1, 1]} : vector<2x128xf32> to vector<2x32xf32>
    %25 = arith.mulf %22, %9 : vector<2x32xf32>
    %26 = arith.mulf %21, %23 : vector<2x32xf32>
    %27 = arith.addf %25, %26 : vector<2x32xf32>
    %28 = math.tanh %27 : vector<2x32xf32>
    %29 = arith.mulf %24, %28 : vector<2x32xf32>
    %c1_i32 = arith.constant 1 : i32
    %c2_i32_14 = arith.constant 2 : i32
    %30 = arith.muli %c1_i32, %c2_i32_14 : i32
    %31 = arith.index_cast %30 : i32 to index
    %c0_15 = arith.constant 0 : index
    %32 = vector.load %arg7[%31, %c0_15] : memref<16x128xf32, #tpu.memory_space<vmem>>, vector<2x128xf32>
    %cst_16 = arith.constant dense<0.000000e+00> : vector<2x128xf32>
    %33 = tpu.matmul %29, %7, %cst_16 {dimension_numbers = #tpu.dot_dimension_numbers<[1], [0], [0], [1], [0, 0, 1, 1], [], []>} : vector<2x32xf32>, vector<32x128xf32>, vector<2x128xf32> -> vector<2x128xf32>
    %34 = arith.addf %32, %33 : vector<2x128xf32>
    %35 = arith.negf %34 : vector<2x128xf32>
    %36 = math.exp %35 : vector<2x128xf32>
    %cst_17 = arith.constant 1.000000e+00 : f32
    %37 = vector.broadcast %cst_17 : f32 to vector<2x128xf32>
    %38 = arith.addf %37, %36 : vector<2x128xf32>
    %39 = arith.divf %37, %38 : vector<2x128xf32>
    %40 = math.tanh %34 : vector<2x128xf32>
    %41 = vector.extract_strided_slice %39 {offsets = [0, 0], sizes = [2, 32], strides = [1, 1]} : vector<2x128xf32> to vector<2x32xf32>
    %42 = vector.extract_strided_slice %39 {offsets = [0, 32], sizes = [2, 32], strides = [1, 1]} : vector<2x128xf32> to vector<2x32xf32>
    %43 = vector.extract_strided_slice %40 {offsets = [0, 64], sizes = [2, 32], strides = [1, 1]} : vector<2x128xf32> to vector<2x32xf32>
    %44 = vector.extract_strided_slice %39 {offsets = [0, 96], sizes = [2, 32], strides = [1, 1]} : vector<2x128xf32> to vector<2x32xf32>
    %45 = arith.mulf %42, %27 : vector<2x32xf32>
    %46 = arith.mulf %41, %43 : vector<2x32xf32>
    %47 = arith.addf %45, %46 : vector<2x32xf32>
    %48 = math.tanh %47 : vector<2x32xf32>
    %49 = arith.mulf %44, %48 : vector<2x32xf32>
    %c2_i32_18 = arith.constant 2 : i32
    %c2_i32_19 = arith.constant 2 : i32
    %50 = arith.muli %c2_i32_18, %c2_i32_19 : i32
    %51 = arith.index_cast %50 : i32 to index
    %c0_20 = arith.constant 0 : index
    %52 = vector.load %arg7[%51, %c0_20] : memref<16x128xf32, #tpu.memory_space<vmem>>, vector<2x128xf32>
    %cst_21 = arith.constant dense<0.000000e+00> : vector<2x128xf32>
    %53 = tpu.matmul %49, %7, %cst_21 {dimension_numbers = #tpu.dot_dimension_numbers<[1], [0], [0], [1], [0, 0, 1, 1], [], []>} : vector<2x32xf32>, vector<32x128xf32>, vector<2x128xf32> -> vector<2x128xf32>
    %54 = arith.addf %52, %53 : vector<2x128xf32>
    %55 = arith.negf %54 : vector<2x128xf32>
    %56 = math.exp %55 : vector<2x128xf32>
    %cst_22 = arith.constant 1.000000e+00 : f32
    %57 = vector.broadcast %cst_22 : f32 to vector<2x128xf32>
    %58 = arith.addf %57, %56 : vector<2x128xf32>
    %59 = arith.divf %57, %58 : vector<2x128xf32>
    %60 = math.tanh %54 : vector<2x128xf32>
    %61 = vector.extract_strided_slice %59 {offsets = [0, 0], sizes = [2, 32], strides = [1, 1]} : vector<2x128xf32> to vector<2x32xf32>
    %62 = vector.extract_strided_slice %59 {offsets = [0, 32], sizes = [2, 32], strides = [1, 1]} : vector<2x128xf32> to vector<2x32xf32>
    %63 = vector.extract_strided_slice %60 {offsets = [0, 64], sizes = [2, 32], strides = [1, 1]} : vector<2x128xf32> to vector<2x32xf32>
    %64 = vector.extract_strided_slice %59 {offsets = [0, 96], sizes = [2, 32], strides = [1, 1]} : vector<2x128xf32> to vector<2x32xf32>
    %65 = arith.mulf %62, %47 : vector<2x32xf32>
    %66 = arith.mulf %61, %63 : vector<2x32xf32>
    %67 = arith.addf %65, %66 : vector<2x32xf32>
    %68 = math.tanh %67 : vector<2x32xf32>
    %69 = arith.mulf %64, %68 : vector<2x32xf32>
    %c3_i32 = arith.constant 3 : i32
    %c2_i32_23 = arith.constant 2 : i32
    %70 = arith.muli %c3_i32, %c2_i32_23 : i32
    %71 = arith.index_cast %70 : i32 to index
    %c0_24 = arith.constant 0 : index
    %72 = vector.load %arg7[%71, %c0_24] : memref<16x128xf32, #tpu.memory_space<vmem>>, vector<2x128xf32>
    %cst_25 = arith.constant dense<0.000000e+00> : vector<2x128xf32>
    %73 = tpu.matmul %69, %7, %cst_25 {dimension_numbers = #tpu.dot_dimension_numbers<[1], [0], [0], [1], [0, 0, 1, 1], [], []>} : vector<2x32xf32>, vector<32x128xf32>, vector<2x128xf32> -> vector<2x128xf32>
    %74 = arith.addf %72, %73 : vector<2x128xf32>
    %75 = arith.negf %74 : vector<2x128xf32>
    %76 = math.exp %75 : vector<2x128xf32>
    %cst_26 = arith.constant 1.000000e+00 : f32
    %77 = vector.broadcast %cst_26 : f32 to vector<2x128xf32>
    %78 = arith.addf %77, %76 : vector<2x128xf32>
    %79 = arith.divf %77, %78 : vector<2x128xf32>
    %80 = math.tanh %74 : vector<2x128xf32>
    %81 = vector.extract_strided_slice %79 {offsets = [0, 0], sizes = [2, 32], strides = [1, 1]} : vector<2x128xf32> to vector<2x32xf32>
    %82 = vector.extract_strided_slice %79 {offsets = [0, 32], sizes = [2, 32], strides = [1, 1]} : vector<2x128xf32> to vector<2x32xf32>
    %83 = vector.extract_strided_slice %80 {offsets = [0, 64], sizes = [2, 32], strides = [1, 1]} : vector<2x128xf32> to vector<2x32xf32>
    %84 = vector.extract_strided_slice %79 {offsets = [0, 96], sizes = [2, 32], strides = [1, 1]} : vector<2x128xf32> to vector<2x32xf32>
    %85 = arith.mulf %82, %67 : vector<2x32xf32>
    %86 = arith.mulf %81, %83 : vector<2x32xf32>
    %87 = arith.addf %85, %86 : vector<2x32xf32>
    %88 = math.tanh %87 : vector<2x32xf32>
    %89 = arith.mulf %84, %88 : vector<2x32xf32>
    %c4_i32 = arith.constant 4 : i32
    %c2_i32_27 = arith.constant 2 : i32
    %90 = arith.muli %c4_i32, %c2_i32_27 : i32
    %91 = arith.index_cast %90 : i32 to index
    %c0_28 = arith.constant 0 : index
    %92 = vector.load %arg7[%91, %c0_28] : memref<16x128xf32, #tpu.memory_space<vmem>>, vector<2x128xf32>
    %cst_29 = arith.constant dense<0.000000e+00> : vector<2x128xf32>
    %93 = tpu.matmul %89, %7, %cst_29 {dimension_numbers = #tpu.dot_dimension_numbers<[1], [0], [0], [1], [0, 0, 1, 1], [], []>} : vector<2x32xf32>, vector<32x128xf32>, vector<2x128xf32> -> vector<2x128xf32>
    %94 = arith.addf %92, %93 : vector<2x128xf32>
    %95 = arith.negf %94 : vector<2x128xf32>
    %96 = math.exp %95 : vector<2x128xf32>
    %cst_30 = arith.constant 1.000000e+00 : f32
    %97 = vector.broadcast %cst_30 : f32 to vector<2x128xf32>
    %98 = arith.addf %97, %96 : vector<2x128xf32>
    %99 = arith.divf %97, %98 : vector<2x128xf32>
    %100 = math.tanh %94 : vector<2x128xf32>
    %101 = vector.extract_strided_slice %99 {offsets = [0, 0], sizes = [2, 32], strides = [1, 1]} : vector<2x128xf32> to vector<2x32xf32>
    %102 = vector.extract_strided_slice %99 {offsets = [0, 32], sizes = [2, 32], strides = [1, 1]} : vector<2x128xf32> to vector<2x32xf32>
    %103 = vector.extract_strided_slice %100 {offsets = [0, 64], sizes = [2, 32], strides = [1, 1]} : vector<2x128xf32> to vector<2x32xf32>
    %104 = vector.extract_strided_slice %99 {offsets = [0, 96], sizes = [2, 32], strides = [1, 1]} : vector<2x128xf32> to vector<2x32xf32>
    %105 = arith.mulf %102, %87 : vector<2x32xf32>
    %106 = arith.mulf %101, %103 : vector<2x32xf32>
    %107 = arith.addf %105, %106 : vector<2x32xf32>
    %108 = math.tanh %107 : vector<2x32xf32>
    %109 = arith.mulf %104, %108 : vector<2x32xf32>
    %c5_i32 = arith.constant 5 : i32
    %c2_i32_31 = arith.constant 2 : i32
    %110 = arith.muli %c5_i32, %c2_i32_31 : i32
    %111 = arith.index_cast %110 : i32 to index
    %c0_32 = arith.constant 0 : index
    %112 = vector.load %arg7[%111, %c0_32] : memref<16x128xf32, #tpu.memory_space<vmem>>, vector<2x128xf32>
    %cst_33 = arith.constant dense<0.000000e+00> : vector<2x128xf32>
    %113 = tpu.matmul %109, %7, %cst_33 {dimension_numbers = #tpu.dot_dimension_numbers<[1], [0], [0], [1], [0, 0, 1, 1], [], []>} : vector<2x32xf32>, vector<32x128xf32>, vector<2x128xf32> -> vector<2x128xf32>
    %114 = arith.addf %112, %113 : vector<2x128xf32>
    %115 = arith.negf %114 : vector<2x128xf32>
    %116 = math.exp %115 : vector<2x128xf32>
    %cst_34 = arith.constant 1.000000e+00 : f32
    %117 = vector.broadcast %cst_34 : f32 to vector<2x128xf32>
    %118 = arith.addf %117, %116 : vector<2x128xf32>
    %119 = arith.divf %117, %118 : vector<2x128xf32>
    %120 = math.tanh %114 : vector<2x128xf32>
    %121 = vector.extract_strided_slice %119 {offsets = [0, 0], sizes = [2, 32], strides = [1, 1]} : vector<2x128xf32> to vector<2x32xf32>
    %122 = vector.extract_strided_slice %119 {offsets = [0, 32], sizes = [2, 32], strides = [1, 1]} : vector<2x128xf32> to vector<2x32xf32>
    %123 = vector.extract_strided_slice %120 {offsets = [0, 64], sizes = [2, 32], strides = [1, 1]} : vector<2x128xf32> to vector<2x32xf32>
    %124 = vector.extract_strided_slice %119 {offsets = [0, 96], sizes = [2, 32], strides = [1, 1]} : vector<2x128xf32> to vector<2x32xf32>
    %125 = arith.mulf %122, %107 : vector<2x32xf32>
    %126 = arith.mulf %121, %123 : vector<2x32xf32>
    %127 = arith.addf %125, %126 : vector<2x32xf32>
    %128 = math.tanh %127 : vector<2x32xf32>
    %129 = arith.mulf %124, %128 : vector<2x32xf32>
    %c6_i32 = arith.constant 6 : i32
    %c2_i32_35 = arith.constant 2 : i32
    %130 = arith.muli %c6_i32, %c2_i32_35 : i32
    %131 = arith.index_cast %130 : i32 to index
    %c0_36 = arith.constant 0 : index
    %132 = vector.load %arg7[%131, %c0_36] : memref<16x128xf32, #tpu.memory_space<vmem>>, vector<2x128xf32>
    %cst_37 = arith.constant dense<0.000000e+00> : vector<2x128xf32>
    %133 = tpu.matmul %129, %7, %cst_37 {dimension_numbers = #tpu.dot_dimension_numbers<[1], [0], [0], [1], [0, 0, 1, 1], [], []>} : vector<2x32xf32>, vector<32x128xf32>, vector<2x128xf32> -> vector<2x128xf32>
    %134 = arith.addf %132, %133 : vector<2x128xf32>
    %135 = arith.negf %134 : vector<2x128xf32>
    %136 = math.exp %135 : vector<2x128xf32>
    %cst_38 = arith.constant 1.000000e+00 : f32
    %137 = vector.broadcast %cst_38 : f32 to vector<2x128xf32>
    %138 = arith.addf %137, %136 : vector<2x128xf32>
    %139 = arith.divf %137, %138 : vector<2x128xf32>
    %140 = math.tanh %134 : vector<2x128xf32>
    %141 = vector.extract_strided_slice %139 {offsets = [0, 0], sizes = [2, 32], strides = [1, 1]} : vector<2x128xf32> to vector<2x32xf32>
    %142 = vector.extract_strided_slice %139 {offsets = [0, 32], sizes = [2, 32], strides = [1, 1]} : vector<2x128xf32> to vector<2x32xf32>
    %143 = vector.extract_strided_slice %140 {offsets = [0, 64], sizes = [2, 32], strides = [1, 1]} : vector<2x128xf32> to vector<2x32xf32>
    %144 = vector.extract_strided_slice %139 {offsets = [0, 96], sizes = [2, 32], strides = [1, 1]} : vector<2x128xf32> to vector<2x32xf32>
    %145 = arith.mulf %142, %127 : vector<2x32xf32>
    %146 = arith.mulf %141, %143 : vector<2x32xf32>
    %147 = arith.addf %145, %146 : vector<2x32xf32>
    %148 = math.tanh %147 : vector<2x32xf32>
    %149 = arith.mulf %144, %148 : vector<2x32xf32>
    %c7_i32 = arith.constant 7 : i32
    %c2_i32_39 = arith.constant 2 : i32
    %150 = arith.muli %c7_i32, %c2_i32_39 : i32
    %151 = arith.index_cast %150 : i32 to index
    %c0_40 = arith.constant 0 : index
    %152 = vector.load %arg7[%151, %c0_40] : memref<16x128xf32, #tpu.memory_space<vmem>>, vector<2x128xf32>
    %cst_41 = arith.constant dense<0.000000e+00> : vector<2x128xf32>
    %153 = tpu.matmul %149, %7, %cst_41 {dimension_numbers = #tpu.dot_dimension_numbers<[1], [0], [0], [1], [0, 0, 1, 1], [], []>} : vector<2x32xf32>, vector<32x128xf32>, vector<2x128xf32> -> vector<2x128xf32>
    %154 = arith.addf %152, %153 : vector<2x128xf32>
    %155 = arith.negf %154 : vector<2x128xf32>
    %156 = math.exp %155 : vector<2x128xf32>
    %cst_42 = arith.constant 1.000000e+00 : f32
    %157 = vector.broadcast %cst_42 : f32 to vector<2x128xf32>
    %158 = arith.addf %157, %156 : vector<2x128xf32>
    %159 = arith.divf %157, %158 : vector<2x128xf32>
    %160 = math.tanh %154 : vector<2x128xf32>
    %161 = vector.extract_strided_slice %159 {offsets = [0, 0], sizes = [2, 32], strides = [1, 1]} : vector<2x128xf32> to vector<2x32xf32>
    %162 = vector.extract_strided_slice %159 {offsets = [0, 32], sizes = [2, 32], strides = [1, 1]} : vector<2x128xf32> to vector<2x32xf32>
    %163 = vector.extract_strided_slice %160 {offsets = [0, 64], sizes = [2, 32], strides = [1, 1]} : vector<2x128xf32> to vector<2x32xf32>
    %164 = vector.extract_strided_slice %159 {offsets = [0, 96], sizes = [2, 32], strides = [1, 1]} : vector<2x128xf32> to vector<2x32xf32>
    %165 = arith.mulf %162, %147 : vector<2x32xf32>
    %166 = arith.mulf %161, %163 : vector<2x32xf32>
    %167 = arith.addf %165, %166 : vector<2x32xf32>
    %168 = math.tanh %167 : vector<2x32xf32>
    %169 = arith.mulf %164, %168 : vector<2x32xf32>
    %c8_i32 = arith.constant 8 : i32
    %c0_43 = arith.constant 0 : index
    %c0_44 = arith.constant 0 : index
    %170 = vector.load %arg4[%c0_43, %c0_44] : memref<32x1xf32, #tpu.memory_space<vmem>>, vector<32x1xf32>
    %cst_45 = arith.constant dense<0.000000e+00> : vector<2x1xf32>
    %171 = tpu.matmul %169, %170, %cst_45 {dimension_numbers = #tpu.dot_dimension_numbers<[1], [0], [0], [1], [0, 0, 1, 1], [], []>} : vector<2x32xf32>, vector<32x1xf32>, vector<2x1xf32> -> vector<2x1xf32>
    %c0_46 = arith.constant 0 : index
    %c0_47 = arith.constant 0 : index
    %172 = vector.load %arg5[%c0_46, %c0_47] : memref<1x1xf32, #tpu.memory_space<vmem>>, vector<1x1xf32>
    %173 = vector.broadcast %172 : vector<1x1xf32> to vector<2x1xf32>
    %174 = arith.addf %171, %173 : vector<2x1xf32>
    %175 = vector.shape_cast %174 : vector<2x1xf32> to vector<1x2x1xf32>
    %c0_48 = arith.constant 0 : index
    %c0_49 = arith.constant 0 : index
    %c0_50 = arith.constant 0 : index
    %176 = vector.load %arg6[%c0_48, %c0_49, %c0_50] : memref<1x2x1xf32, #tpu.memory_space<vmem>>, vector<1x2x1xf32>
    tpu.vector_store %arg6[%c0_48, %c0_49, %c0_50], %175 {strides = array<i32>} : memref<1x2x1xf32, #tpu.memory_space<vmem>>, vector<1x2x1xf32>,
    return
  }
}

</mosaic_0001>

<llo_original>
// kernel: tpu_custom_call.1
$region0: #{tpu_custom_call.1}
  #allocation0 [shape = 'u32[]', space=smem, size = 0x4, offset = 0x4, fixed_abs, tag = 'smem constant byte address 0x4 - core index']
  #allocation1 [shape = 'u32[144,128]{1,0:T(1,128)}', space=vmem, size = 0x12000, scoped, tag = 'internal scratch']
  #allocation2 [shape = 'f32[16,128]{1,0:T(8,128)}', space=vmem, size = 0x2000, scoped, tag = 'scratch operand']
  #allocation3 [shape = 'f32[1,1]{1,0:T(1,128)S(1)}', space=vmem, size = 0x200, scoped, tag = 'scoped memory for tpu_custom_call.1']
  %s0 = inlined_call_operand.vmem [shape: f32[16,8], index: 0, kind: input, shape index: {}]
  %s1 = inlined_call_operand.vmem [shape: f32[8,128], index: 1, kind: input, shape index: {}]
  %s2 = inlined_call_operand.vmem [shape: f32[32,128], index: 2, kind: input, shape index: {}]
  %s3 = inlined_call_operand.vmem [shape: f32[1,128], index: 3, kind: input, shape index: {}]
  %s4 = inlined_call_operand.vmem [shape: f32[32,1], index: 4, kind: input, shape index: {}]
  %s5 = inlined_call_operand.<no memory space> [shape: f32[1,1], index: 5, kind: input, shape index: {}]
  %s6 = inlined_call_operand.vmem [shape: f32[1,2,1], index: 6, kind: output, shape index: {}]
  %s7 = sld [smem:[#allocation0]]
  $region34: #{tpu_custom_call.1} parent=0
    _
  %s9 = ssub.s32 1, %s7
  %s10 = scalar_select 0, %s9, %s7
  %v11 = vstv %s5
  %12 = vst [vmem:[#allocation3] sm:$0x1] %v11
  // Predicated region
  $region2: #{tpu_custom_call.1} parent=0 // pred_check
    _
  $region3: #{tpu_custom_call.1} parent=0 // pred_check_branch
    %14 = sbr.rel (0) target = $region5
  $region4: #{tpu_custom_call.1} parent=0 // pred_region
    _
  $region5: #{tpu_custom_call.1} parent=0 // pred_fallthru
    _
  // Predicated region
  $region6: #{tpu_custom_call.1} parent=0 // pred_check
    _
  $region7: #{tpu_custom_call.1} parent=0 // pred_check_branch
    %16 = sbr.rel (0) target = $region9
  $region8: #{tpu_custom_call.1} parent=0 // pred_region
    _
  $region9: #{tpu_custom_call.1} parent=0 // pred_fallthru
    _
  // Predicated region
  $region10: #{tpu_custom_call.1} parent=0 // pred_check
    _
  $region11: #{tpu_custom_call.1} parent=0 // pred_check_branch
    %18 = sbr.rel (0) target = $region13
  $region12: #{tpu_custom_call.1} parent=0 // pred_region
    _
  $region13: #{tpu_custom_call.1} parent=0 // pred_fallthru
    _
  // Predicated region
  $region14: #{tpu_custom_call.1} parent=0 // pred_check
    _
  $region15: #{tpu_custom_call.1} parent=0 // pred_check_branch
    %20 = sbr.rel (0) target = $region17
  $region16: #{tpu_custom_call.1} parent=0 // pred_region
    _
  $region17: #{tpu_custom_call.1} parent=0 // pred_fallthru
    _
  // Predicated region
  $region18: #{tpu_custom_call.1} parent=0 // pred_check
    _
  $region19: #{tpu_custom_call.1} parent=0 // pred_check_branch
    %22 = sbr.rel (0) target = $region21
  $region20: #{tpu_custom_call.1} parent=0 // pred_region
    _
  $region21: #{tpu_custom_call.1} parent=0 // pred_fallthru
    _
  // Predicated region
  $region22: #{tpu_custom_call.1} parent=0 // pred_check
    _
  $region23: #{tpu_custom_call.1} parent=0 // pred_check_branch
    %24 = sbr.rel (0) target = $region25
  $region24: #{tpu_custom_call.1} parent=0 // pred_region
    _
  $region25: #{tpu_custom_call.1} parent=0 // pred_fallthru
    _
  %v25 = vld [vmem:[%s0] sm:$0xff]
  %v26 = vld [vmem:[%s0 + $0x8] sm:$0xff]
  %v27 = vld [vmem:[%s1] sm:$0xff]
  %v28 = vld [vmem:[%s3] sm:$0x1]
  %v30 = vlaneseq
  %v31 = vshrl.u32 %v30, 7
  %v32 = vsub.s32 0, %v31
  %v33 = vrot.slane %v28, %v32
  %vm35 = vcmask 64512
  %v37 = vsel %vm35, %v25, 0
  %v40 = vsel %vm35, %v26, 0
  %42 = vmatprep.subr.mxu0 0.0
  %43 = vmatpush1.msra.mxu0 0.0
  %44 = vmatprep.subr.mxu0 0.0
  %45 = vmatpush1.msra.mxu0 0.0
  %46 = vmatprep.subr.mxu0 0.0
  %47 = vmatpush1.msra.mxu0 0.0
  %48 = vmatprep.subr.mxu0 0.0
  %49 = vmatpush1.msra.mxu0 0.0
  %50 = vmatprep.subr.mxu0 0.0
  %51 = vmatpush1.msra.mxu0 0.0
  %52 = vmatprep.subr.mxu0 0.0
  %53 = vmatpush1.msra.mxu0 0.0
  %54 = vmatprep.subr.mxu0 0.0
  %55 = vmatpush1.msra.mxu0 0.0
  %56 = vmatprep.subr.mxu0 0.0
  %57 = vmatpush1.msra.mxu0 0.0
  %58 = vmatprep.subr.mxu0 0.0
  %59 = vmatpush1.msra.mxu0 0.0
  %60 = vmatprep.subr.mxu0 0.0
  %61 = vmatpush1.msra.mxu0 0.0
  %62 = vmatprep.subr.mxu0 0.0
  %63 = vmatpush1.msra.mxu0 0.0
  %64 = vmatprep.subr.mxu0 0.0
  %65 = vmatpush1.msra.mxu0 0.0
  %66 = vmatprep.subr.mxu0 0.0
  %67 = vmatpush1.msra.mxu0 0.0
  %68 = vmatprep.subr.mxu0 0.0
  %69 = vmatpush1.msra.mxu0 0.0
  %70 = vmatprep.subr.mxu0 0.0
  %71 = vmatpush1.msra.mxu0 0.0
  %72 = vmatprep.subr.mxu0 0.0
  %73 = vmatpush1.msra.mxu0 %v27
  %74 = vmatprep.subr.mxu0 0.0
  %75 = vmatpush2.msra.mxu0 0.0
  %76 = vmatprep.subr.mxu0 0.0
  %77 = vmatpush2.msra.mxu0 0.0
  %78 = vmatprep.subr.mxu0 0.0
  %79 = vmatpush2.msra.mxu0 0.0
  %80 = vmatprep.subr.mxu0 0.0
  %81 = vmatpush2.msra.mxu0 0.0
  %82 = vmatprep.subr.mxu0 0.0
  %83 = vmatpush2.msra.mxu0 0.0
  %84 = vmatprep.subr.mxu0 0.0
  %85 = vmatpush2.msra.mxu0 0.0
  %86 = vmatprep.subr.mxu0 0.0
  %87 = vmatpush2.msra.mxu0 0.0
  %88 = vmatprep.subr.mxu0 0.0
  %89 = vmatpush2.msra.mxu0 0.0
  %90 = vmatprep.subr.mxu0 0.0
  %91 = vmatpush2.msra.mxu0 0.0
  %92 = vmatprep.subr.mxu0 0.0
  %93 = vmatpush2.msra.mxu0 0.0
  %94 = vmatprep.subr.mxu0 0.0
  %95 = vmatpush2.msra.mxu0 0.0
  %96 = vmatprep.subr.mxu0 0.0
  %97 = vmatpush2.msra.mxu0 0.0
  %98 = vmatprep.subr.mxu0 0.0
  %99 = vmatpush2.msra.mxu0 0.0
  %100 = vmatprep.subr.mxu0 0.0
  %101 = vmatpush2.msra.mxu0 0.0
  %102 = vmatprep.subr.mxu0 0.0
  %103 = vmatpush2.msra.mxu0 0.0
  %104 = vmatprep.subr.mxu0 0.0
  %105 = vmatpush2.msra.mxu0 0.0
  %106 = vmatprep.mubr.f32.mxu0 0.0
  %107 = vmatmul.mubr.f32.gmra.mxu0 %v37
  %v108 = vpop.f32.mrf.mxu0
  %v109 = vadd.f32 %v33, %v108
  %v110 = vpop.f32.mrf.mxu0
  %111 = vmatprep.mubr.f32.mxu0 0.0
  %112 = vmatmul.mubr.f32.gmra.mxu0 %v40
  %v113 = vpop.f32.mrf.mxu0
  %v114 = vadd.f32 %v33, %v113
  %v115 = vpop.f32.mrf.mxu0
  %116 = vdwg.mxu0
  %117 = vst [vmem:[#allocation2] sm:$0xff] %v109
  %118 = vst [vmem:[#allocation2 + $0x8] sm:$0xff] %v114
  %v119 = vld [vmem:[%s2] sm:$0xff]
  %v120 = vld [vmem:[%s2 + $0x8] sm:$0xff]
  %v121 = vld [vmem:[%s2 + $0x10] sm:$0xff]
  %v122 = vld [vmem:[%s2 + $0x18] sm:$0xff]
  %v123 = vld [vmem:[#allocation2] sm:$0x3]
  %vm124 = vcmask 261120
  %v126 = vsel %vm124, 0.0, 0
  %128 = vmatprep.subr.mxu0 0.0
  %129 = vmatpush1.msra.mxu0 0.0
  %130 = vmatprep.subr.mxu0 0.0
  %131 = vmatpush1.msra.mxu0 0.0
  %132 = vmatprep.subr.mxu0 0.0
  %133 = vmatpush1.msra.mxu0 0.0
  %134 = vmatprep.subr.mxu0 0.0
  %135 = vmatpush1.msra.mxu0 0.0
  %136 = vmatprep.subr.mxu0 0.0
  %137 = vmatpush1.msra.mxu0 0.0
  %138 = vmatprep.subr.mxu0 0.0
  %139 = vmatpush1.msra.mxu0 0.0
  %140 = vmatprep.subr.mxu0 0.0
  %141 = vmatpush1.msra.mxu0 0.0
  %142 = vmatprep.subr.mxu0 0.0
  %143 = vmatpush1.msra.mxu0 0.0
  %144 = vmatprep.subr.mxu0 0.0
  %145 = vmatpush1.msra.mxu0 0.0
  %146 = vmatprep.subr.mxu0 0.0
  %147 = vmatpush1.msra.mxu0 0.0
  %148 = vmatprep.subr.mxu0 0.0
  %149 = vmatpush1.msra.mxu0 0.0
  %150 = vmatprep.subr.mxu0 0.0
  %151 = vmatpush1.msra.mxu0 0.0
  %152 = vmatprep.subr.mxu0 0.0
  %153 = vmatpush1.msra.mxu0 %v122
  %154 = vmatprep.subr.mxu0 0.0
  %155 = vmatpush1.msra.mxu0 %v121
  %156 = vmatprep.subr.mxu0 0.0
  %157 = vmatpush1.msra.mxu0 %v120
  %158 = vmatprep.subr.mxu0 0.0
  %159 = vmatpush1.msra.mxu0 %v119
  %160 = vmatprep.subr.mxu0 0.0
  %161 = vmatpush2.msra.mxu0 0.0
  %162 = vmatprep.subr.mxu0 0.0
  %163 = vmatpush2.msra.mxu0 0.0
  %164 = vmatprep.subr.mxu0 0.0
  %165 = vmatpush2.msra.mxu0 0.0
  %166 = vmatprep.subr.mxu0 0.0
  %167 = vmatpush2.msra.mxu0 0.0
  %168 = vmatprep.subr.mxu0 0.0
  %169 = vmatpush2.msra.mxu0 0.0
  %170 = vmatprep.subr.mxu0 0.0
  %171 = vmatpush2.msra.mxu0 0.0
  %172 = vmatprep.subr.mxu0 0.0
  %173 = vmatpush2.msra.mxu0 0.0
  %174 = vmatprep.subr.mxu0 0.0
  %175 = vmatpush2.msra.mxu0 0.0
  %176 = vmatprep.subr.mxu0 0.0
  %177 = vmatpush2.msra.mxu0 0.0
  %178 = vmatprep.subr.mxu0 0.0
  %179 = vmatpush2.msra.mxu0 0.0
  %180 = vmatprep.subr.mxu0 0.0
  %181 = vmatpush2.msra.mxu0 0.0
  %182 = vmatprep.subr.mxu0 0.0
  %183 = vmatpush2.msra.mxu0 0.0
  %184 = vmatprep.subr.mxu0 0.0
  %185 = vmatpush2.msra.mxu0 0.0
  %186 = vmatprep.subr.mxu0 0.0
  %187 = vmatpush2.msra.mxu0 0.0
  %188 = vmatprep.subr.mxu0 0.0
  %189 = vmatpush2.msra.mxu0 0.0
  %190 = vmatprep.subr.mxu0 0.0
  %191 = vmatpush2.msra.mxu0 0.0
  %192 = vmatprep.mubr.f32.mxu0 0.0
  %193 = vmatmul.mubr.f32.gmra.mxu0 %v126
  %v194 = vpop.f32.mrf.mxu0
  %v195 = vadd.f32 0.0, %v194
  %v196 = vpop.f32.mrf.mxu0
  %197 = vdwg.mxu0
  %v198 = vadd.f32 %v123, %v195
  %v199 = vxor.u32 %v198, 2147483648
  %v200 = vmul.f32 %v199, 1.442695
  %v201 = vpow.pop %v200
  %v202 = vadd.f32 %v201, 1.0
  %v203 = vrcp.pop %v202
  %v204 = vmul.f32 1.0, %v203
  %v205 = vtanh.pop %v198
  %v206 = vmul.f32 %v204, 0.0
  %208 = vrot.lane.b32.xlu0 %v205, 64
  %v209 = vpop.permute.xlu0 %208
  %v211 = vmul.f32 %v204, %v209
  %213 = vrot.lane.b32.xlu0 %v211, 32
  %v214 = vpop.permute.xlu0 %213
  %v216 = vadd.f32 %v206, %v214
  %v217 = vtanh.pop %v216
  %219 = vrot.lane.b32.xlu0 %v217, 64
  %v220 = vpop.permute.xlu0 %219
  %v222 = vmul.f32 %v204, %v220
  %v223 = vld [vmem:[#allocation2 + $0x2] sm:$0x3]
  %225 = vrot.lane.b32.xlu0 %v222, 32
  %v226 = vpop.permute.xlu0 %225
  %v227 = vsel %vm124, %v226, 0
  %229 = vmatprep.subr.mxu0 0.0
  %230 = vmatpush1.msra.mxu0 0.0
  %231 = vmatprep.subr.mxu0 0.0
  %232 = vmatpush1.msra.mxu0 0.0
  %233 = vmatprep.subr.mxu0 0.0
  %234 = vmatpush1.msra.mxu0 0.0
  %235 = vmatprep.subr.mxu0 0.0
  %236 = vmatpush1.msra.mxu0 0.0
  %237 = vmatprep.subr.mxu0 0.0
  %238 = vmatpush1.msra.mxu0 0.0
  %239 = vmatprep.subr.mxu0 0.0
  %240 = vmatpush1.msra.mxu0 0.0
  %241 = vmatprep.subr.mxu0 0.0
  %242 = vmatpush1.msra.mxu0 0.0
  %243 = vmatprep.subr.mxu0 0.0
  %244 = vmatpush1.msra.mxu0 0.0
  %245 = vmatprep.subr.mxu0 0.0
  %246 = vmatpush1.msra.mxu0 0.0
  %247 = vmatprep.subr.mxu0 0.0
  %248 = vmatpush1.msra.mxu0 0.0
  %249 = vmatprep.subr.mxu0 0.0
  %250 = vmatpush1.msra.mxu0 0.0
  %251 = vmatprep.subr.mxu0 0.0
  %252 = vmatpush1.msra.mxu0 0.0
  %253 = vmatprep.subr.mxu0 0.0
  %254 = vmatpush1.msra.mxu0 %v122
  %255 = vmatprep.subr.mxu0 0.0
  %256 = vmatpush1.msra.mxu0 %v121
  %257 = vmatprep.subr.mxu0 0.0
  %258 = vmatpush1.msra.mxu0 %v120
  %259 = vmatprep.subr.mxu0 0.0
  %260 = vmatpush1.msra.mxu0 %v119
  %261 = vmatprep.subr.mxu0 0.0
  %262 = vmatpush2.msra.mxu0 0.0
  %263 = vmatprep.subr.mxu0 0.0
  %264 = vmatpush2.msra.mxu0 0.0
  %265 = vmatprep.subr.mxu0 0.0
  %266 = vmatpush2.msra.mxu0 0.0
  %267 = vmatprep.subr.mxu0 0.0
  %268 = vmatpush2.msra.mxu0 0.0
  %269 = vmatprep.subr.mxu0 0.0
  %270 = vmatpush2.msra.mxu0 0.0
  %271 = vmatprep.subr.mxu0 0.0
  %272 = vmatpush2.msra.mxu0 0.0
  %273 = vmatprep.subr.mxu0 0.0
  %274 = vmatpush2.msra.mxu0 0.0
  %275 = vmatprep.subr.mxu0 0.0
  %276 = vmatpush2.msra.mxu0 0.0
  %277 = vmatprep.subr.mxu0 0.0
  %278 = vmatpush2.msra.mxu0 0.0
  %279 = vmatprep.subr.mxu0 0.0
  %280 = vmatpush2.msra.mxu0 0.0
  %281 = vmatprep.subr.mxu0 0.0
  %282 = vmatpush2.msra.mxu0 0.0
  %283 = vmatprep.subr.mxu0 0.0
  %284 = vmatpush2.msra.mxu0 0.0
  %285 = vmatprep.subr.mxu0 0.0
  %286 = vmatpush2.msra.mxu0 0.0
  %287 = vmatprep.subr.mxu0 0.0
  %288 = vmatpush2.msra.mxu0 0.0
  %289 = vmatprep.subr.mxu0 0.0
  %290 = vmatpush2.msra.mxu0 0.0
  %291 = vmatprep.subr.mxu0 0.0
  %292 = vmatpush2.msra.mxu0 0.0
  %293 = vmatprep.mubr.f32.mxu0 0.0
  %294 = vmatmul.mubr.f32.gmra.mxu0 %v227
  %v295 = vpop.f32.mrf.mxu0
  %v296 = vadd.f32 0.0, %v295
  %v297 = vpop.f32.mrf.mxu0
  %298 = vdwg.mxu0
  %v299 = vadd.f32 %v223, %v296
  %v300 = vxor.u32 %v299, 2147483648
  %v301 = vmul.f32 %v300, 1.442695
  %v302 = vpow.pop %v301
  %v303 = vadd.f32 %v302, 1.0
  %v304 = vrcp.pop %v303
  %v305 = vmul.f32 1.0, %v304
  %v306 = vtanh.pop %v299
  %v307 = vmul.f32 %v305, %v216
  %309 = vrot.lane.b32.xlu0 %v306, 64
  %v310 = vpop.permute.xlu0 %309
  %v312 = vmul.f32 %v305, %v310
  %314 = vrot.lane.b32.xlu0 %v312, 32
  %v315 = vpop.permute.xlu0 %314
  %v317 = vadd.f32 %v307, %v315
  %v318 = vtanh.pop %v317
  %320 = vrot.lane.b32.xlu0 %v318, 64
  %v321 = vpop.permute.xlu0 %320
  %v323 = vmul.f32 %v305, %v321
  %v324 = vld [vmem:[#allocation2 + $0x4] sm:$0x3]
  %326 = vrot.lane.b32.xlu0 %v323, 32
  %v327 = vpop.permute.xlu0 %326
  %v328 = vsel %vm124, %v327, 0
  %330 = vmatprep.subr.mxu0 0.0
  %331 = vmatpush1.msra.mxu0 0.0
  %332 = vmatprep.subr.mxu0 0.0
  %333 = vmatpush1.msra.mxu0 0.0
  %334 = vmatprep.subr.mxu0 0.0
  %335 = vmatpush1.msra.mxu0 0.0
  %336 = vmatprep.subr.mxu0 0.0
  %337 = vmatpush1.msra.mxu0 0.0
  %338 = vmatprep.subr.mxu0 0.0
  %339 = vmatpush1.msra.mxu0 0.0
  %340 = vmatprep.subr.mxu0 0.0
  %341 = vmatpush1.msra.mxu0 0.0
  %342 = vmatprep.subr.mxu0 0.0
  %343 = vmatpush1.msra.mxu0 0.0
  %344 = vmatprep.subr.mxu0 0.0
  %345 = vmatpush1.msra.mxu0 0.0
  %346 = vmatprep.subr.mxu0 0.0
  %347 = vmatpush1.msra.mxu0 0.0
  %348 = vmatprep.subr.mxu0 0.0
  %349 = vmatpush1.msra.mxu0 0.0
  %350 = vmatprep.subr.mxu0 0.0
  %351 = vmatpush1.msra.mxu0 0.0
  %352 = vmatprep.subr.mxu0 0.0
  %353 = vmatpush1.msra.mxu0 0.0
  %354 = vmatprep.subr.mxu0 0.0
  %355 = vmatpush1.msra.mxu0 %v122
  %356 = vmatprep.subr.mxu0 0.0
  %357 = vmatpush1.msra.mxu0 %v121
  %358 = vmatprep.subr.mxu0 0.0
  %359 = vmatpush1.msra.mxu0 %v120
  %360 = vmatprep.subr.mxu0 0.0
  %361 = vmatpush1.msra.mxu0 %v119
  %362 = vmatprep.subr.mxu0 0.0
  %363 = vmatpush2.msra.mxu0 0.0
  %364 = vmatprep.subr.mxu0 0.0
  %365 = vmatpush2.msra.mxu0 0.0
  %366 = vmatprep.subr.mxu0 0.0
  %367 = vmatpush2.msra.mxu0 0.0
  %368 = vmatprep.subr.mxu0 0.0
  %369 = vmatpush2.msra.mxu0 0.0
  %370 = vmatprep.subr.mxu0 0.0
  %371 = vmatpush2.msra.mxu0 0.0
  %372 = vmatprep.subr.mxu0 0.0
  %373 = vmatpush2.msra.mxu0 0.0
  %374 = vmatprep.subr.mxu0 0.0
  %375 = vmatpush2.msra.mxu0 0.0
  %376 = vmatprep.subr.mxu0 0.0
  %377 = vmatpush2.msra.mxu0 0.0
  %378 = vmatprep.subr.mxu0 0.0
  %379 = vmatpush2.msra.mxu0 0.0
  %380 = vmatprep.subr.mxu0 0.0
  %381 = vmatpush2.msra.mxu0 0.0
  %382 = vmatprep.subr.mxu0 0.0
  %383 = vmatpush2.msra.mxu0 0.0
  %384 = vmatprep.subr.mxu0 0.0
  %385 = vmatpush2.msra.mxu0 0.0
  %386 = vmatprep.subr.mxu0 0.0
  %387 = vmatpush2.msra.mxu0 0.0
  %388 = vmatprep.subr.mxu0 0.0
  %389 = vmatpush2.msra.mxu0 0.0
  %390 = vmatprep.subr.mxu0 0.0
  %391 = vmatpush2.msra.mxu0 0.0
  %392 = vmatprep.subr.mxu0 0.0
  %393 = vmatpush2.msra.mxu0 0.0
  %394 = vmatprep.mubr.f32.mxu0 0.0
  %395 = vmatmul.mubr.f32.gmra.mxu0 %v328
  %v396 = vpop.f32.mrf.mxu0
  %v397 = vadd.f32 0.0, %v396
  %v398 = vpop.f32.mrf.mxu0
  %399 = vdwg.mxu0
  %v400 = vadd.f32 %v324, %v397
  %v401 = vxor.u32 %v400, 2147483648
  %v402 = vmul.f32 %v401, 1.442695
  %v403 = vpow.pop %v402
  %v404 = vadd.f32 %v403, 1.0
  %v405 = vrcp.pop %v404
  %v406 = vmul.f32 1.0, %v405
  %v407 = vtanh.pop %v400
  %v408 = vmul.f32 %v406, %v317
  %410 = vrot.lane.b32.xlu0 %v407, 64
  %v411 = vpop.permute.xlu0 %410
  %v413 = vmul.f32 %v406, %v411
  %415 = vrot.lane.b32.xlu0 %v413, 32
  %v416 = vpop.permute.xlu0 %415
  %v418 = vadd.f32 %v408, %v416
  %v419 = vtanh.pop %v418
  %421 = vrot.lane.b32.xlu0 %v419, 64
  %v422 = vpop.permute.xlu0 %421
  %v424 = vmul.f32 %v406, %v422
  %v425 = vld [vmem:[#allocation2 + $0x6] sm:$0x3]
  %427 = vrot.lane.b32.xlu0 %v424, 32
  %v428 = vpop.permute.xlu0 %427
  %v429 = vsel %vm124, %v428, 0
  %431 = vmatprep.subr.mxu0 0.0
  %432 = vmatpush1.msra.mxu0 0.0
  %433 = vmatprep.subr.mxu0 0.0
  %434 = vmatpush1.msra.mxu0 0.0
  %435 = vmatprep.subr.mxu0 0.0
  %436 = vmatpush1.msra.mxu0 0.0
  %437 = vmatprep.subr.mxu0 0.0
  %438 = vmatpush1.msra.mxu0 0.0
  %439 = vmatprep.subr.mxu0 0.0
  %440 = vmatpush1.msra.mxu0 0.0
  %441 = vmatprep.subr.mxu0 0.0
  %442 = vmatpush1.msra.mxu0 0.0
  %443 = vmatprep.subr.mxu0 0.0
  %444 = vmatpush1.msra.mxu0 0.0
  %445 = vmatprep.subr.mxu0 0.0
  %446 = vmatpush1.msra.mxu0 0.0
  %447 = vmatprep.subr.mxu0 0.0
  %448 = vmatpush1.msra.mxu0 0.0
  %449 = vmatprep.subr.mxu0 0.0
  %450 = vmatpush1.msra.mxu0 0.0
  %451 = vmatprep.subr.mxu0 0.0
  %452 = vmatpush1.msra.mxu0 0.0
  %453 = vmatprep.subr.mxu0 0.0
  %454 = vmatpush1.msra.mxu0 0.0
  %455 = vmatprep.subr.mxu0 0.0
  %456 = vmatpush1.msra.mxu0 %v122
  %457 = vmatprep.subr.mxu0 0.0
  %458 = vmatpush1.msra.mxu0 %v121
  %459 = vmatprep.subr.mxu0 0.0
  %460 = vmatpush1.msra.mxu0 %v120
  %461 = vmatprep.subr.mxu0 0.0
  %462 = vmatpush1.msra.mxu0 %v119
  %463 = vmatprep.subr.mxu0 0.0
  %464 = vmatpush2.msra.mxu0 0.0
  %465 = vmatprep.subr.mxu0 0.0
  %466 = vmatpush2.msra.mxu0 0.0
  %467 = vmatprep.subr.mxu0 0.0
  %468 = vmatpush2.msra.mxu0 0.0
  %469 = vmatprep.subr.mxu0 0.0
  %470 = vmatpush2.msra.mxu0 0.0
  %471 = vmatprep.subr.mxu0 0.0
  %472 = vmatpush2.msra.mxu0 0.0
  %473 = vmatprep.subr.mxu0 0.0
  %474 = vmatpush2.msra.mxu0 0.0
  %475 = vmatprep.subr.mxu0 0.0
  %476 = vmatpush2.msra.mxu0 0.0
  %477 = vmatprep.subr.mxu0 0.0
  %478 = vmatpush2.msra.mxu0 0.0
  %479 = vmatprep.subr.mxu0 0.0
  %480 = vmatpush2.msra.mxu0 0.0
  %481 = vmatprep.subr.mxu0 0.0
  %482 = vmatpush2.msra.mxu0 0.0
  %483 = vmatprep.subr.mxu0 0.0
  %484 = vmatpush2.msra.mxu0 0.0
  %485 = vmatprep.subr.mxu0 0.0
  %486 = vmatpush2.msra.mxu0 0.0
  %487 = vmatprep.subr.mxu0 0.0
  %488 = vmatpush2.msra.mxu0 0.0
  %489 = vmatprep.subr.mxu0 0.0
  %490 = vmatpush2.msra.mxu0 0.0
  %491 = vmatprep.subr.mxu0 0.0
  %492 = vmatpush2.msra.mxu0 0.0
  %493 = vmatprep.subr.mxu0 0.0
  %494 = vmatpush2.msra.mxu0 0.0
  %495 = vmatprep.mubr.f32.mxu0 0.0
  %496 = vmatmul.mubr.f32.gmra.mxu0 %v429
  %v497 = vpop.f32.mrf.mxu0
  %v498 = vadd.f32 0.0, %v497
  %v499 = vpop.f32.mrf.mxu0
  %500 = vdwg.mxu0
  %v501 = vadd.f32 %v425, %v498
  %v502 = vxor.u32 %v501, 2147483648
  %v503 = vmul.f32 %v502, 1.442695
  %v504 = vpow.pop %v503
  %v505 = vadd.f32 %v504, 1.0
  %v506 = vrcp.pop %v505
  %v507 = vmul.f32 1.0, %v506
  %v508 = vtanh.pop %v501
  %v509 = vmul.f32 %v507, %v418
  %511 = vrot.lane.b32.xlu0 %v508, 64
  %v512 = vpop.permute.xlu0 %511
  %v514 = vmul.f32 %v507, %v512
  %516 = vrot.lane.b32.xlu0 %v514, 32
  %v517 = vpop.permute.xlu0 %516
  %v519 = vadd.f32 %v509, %v517
  %v520 = vtanh.pop %v519
  %522 = vrot.lane.b32.xlu0 %v520, 64
  %v523 = vpop.permute.xlu0 %522
  %v525 = vmul.f32 %v507, %v523
  %v526 = vld [vmem:[#allocation2 + $0x8] sm:$0x3]
  %528 = vrot.lane.b32.xlu0 %v525, 32
  %v529 = vpop.permute.xlu0 %528
  %v530 = vsel %vm124, %v529, 0
  %532 = vmatprep.subr.mxu0 0.0
  %533 = vmatpush1.msra.mxu0 0.0
  %534 = vmatprep.subr.mxu0 0.0
  %535 = vmatpush1.msra.mxu0 0.0
  %536 = vmatprep.subr.mxu0 0.0
  %537 = vmatpush1.msra.mxu0 0.0
  %538 = vmatprep.subr.mxu0 0.0
  %539 = vmatpush1.msra.mxu0 0.0
  %540 = vmatprep.subr.mxu0 0.0
  %541 = vmatpush1.msra.mxu0 0.0
  %542 = vmatprep.subr.mxu0 0.0
  %543 = vmatpush1.msra.mxu0 0.0
  %544 = vmatprep.subr.mxu0 0.0
  %545 = vmatpush1.msra.mxu0 0.0
  %546 = vmatprep.subr.mxu0 0.0
  %547 = vmatpush1.msra.mxu0 0.0
  %548 = vmatprep.subr.mxu0 0.0
  %549 = vmatpush1.msra.mxu0 0.0
  %550 = vmatprep.subr.mxu0 0.0
  %551 = vmatpush1.msra.mxu0 0.0
  %552 = vmatprep.subr.mxu0 0.0
  %553 = vmatpush1.msra.mxu0 0.0
  %554 = vmatprep.subr.mxu0 0.0
  %555 = vmatpush1.msra.mxu0 0.0
  %556 = vmatprep.subr.mxu0 0.0
  %557 = vmatpush1.msra.mxu0 %v122
  %558 = vmatprep.subr.mxu0 0.0
  %559 = vmatpush1.msra.mxu0 %v121
  %560 = vmatprep.subr.mxu0 0.0
  %561 = vmatpush1.msra.mxu0 %v120
  %562 = vmatprep.subr.mxu0 0.0
  %563 = vmatpush1.msra.mxu0 %v119
  %564 = vmatprep.subr.mxu0 0.0
  %565 = vmatpush2.msra.mxu0 0.0
  %566 = vmatprep.subr.mxu0 0.0
  %567 = vmatpush2.msra.mxu0 0.0
  %568 = vmatprep.subr.mxu0 0.0
  %569 = vmatpush2.msra.mxu0 0.0
  %570 = vmatprep.subr.mxu0 0.0
  %571 = vmatpush2.msra.mxu0 0.0
  %572 = vmatprep.subr.mxu0 0.0
  %573 = vmatpush2.msra.mxu0 0.0
  %574 = vmatprep.subr.mxu0 0.0
  %575 = vmatpush2.msra.mxu0 0.0
  %576 = vmatprep.subr.mxu0 0.0
  %577 = vmatpush2.msra.mxu0 0.0
  %578 = vmatprep.subr.mxu0 0.0
  %579 = vmatpush2.msra.mxu0 0.0
  %580 = vmatprep.subr.mxu0 0.0
  %581 = vmatpush2.msra.mxu0 0.0
  %582 = vmatprep.subr.mxu0 0.0
  %583 = vmatpush2.msra.mxu0 0.0
  %584 = vmatprep.subr.mxu0 0.0
  %585 = vmatpush2.msra.mxu0 0.0
  %586 = vmatprep.subr.mxu0 0.0
  %587 = vmatpush2.msra.mxu0 0.0
  %588 = vmatprep.subr.mxu0 0.0
  %589 = vmatpush2.msra.mxu0 0.0
  %590 = vmatprep.subr.mxu0 0.0
  %591 = vmatpush2.msra.mxu0 0.0
  %592 = vmatprep.subr.mxu0 0.0
  %593 = vmatpush2.msra.mxu0 0.0
  %594 = vmatprep.subr.mxu0 0.0
  %595 = vmatpush2.msra.mxu0 0.0
  %596 = vmatprep.mubr.f32.mxu0 0.0
  %597 = vmatmul.mubr.f32.gmra.mxu0 %v530
  %v598 = vpop.f32.mrf.mxu0
  %v599 = vadd.f32 0.0, %v598
  %v600 = vpop.f32.mrf.mxu0
  %601 = vdwg.mxu0
  %v602 = vadd.f32 %v526, %v599
  %v603 = vxor.u32 %v602, 2147483648
  %v604 = vmul.f32 %v603, 1.442695
  %v605 = vpow.pop %v604
  %v606 = vadd.f32 %v605, 1.0
  %v607 = vrcp.pop %v606
  %v608 = vmul.f32 1.0, %v607
  %v609 = vtanh.pop %v602
  %v610 = vmul.f32 %v608, %v519
  %612 = vrot.lane.b32.xlu0 %v609, 64
  %v613 = vpop.permute.xlu0 %612
  %v615 = vmul.f32 %v608, %v613
  %617 = vrot.lane.b32.xlu0 %v615, 32
  %v618 = vpop.permute.xlu0 %617
  %v620 = vadd.f32 %v610, %v618
  %v621 = vtanh.pop %v620
  %623 = vrot.lane.b32.xlu0 %v621, 64
  %v624 = vpop.permute.xlu0 %623
  %v626 = vmul.f32 %v608, %v624
  %v627 = vld [vmem:[#allocation2 + $0xa] sm:$0x3]
  %629 = vrot.lane.b32.xlu0 %v626, 32
  %v630 = vpop.permute.xlu0 %629
  %v631 = vsel %vm124, %v630, 0
  %633 = vmatprep.subr.mxu0 0.0
  %634 = vmatpush1.msra.mxu0 0.0
  %635 = vmatprep.subr.mxu0 0.0
  %636 = vmatpush1.msra.mxu0 0.0
  %637 = vmatprep.subr.mxu0 0.0
  %638 = vmatpush1.msra.mxu0 0.0
  %639 = vmatprep.subr.mxu0 0.0
  %640 = vmatpush1.msra.mxu0 0.0
  %641 = vmatprep.subr.mxu0 0.0
  %642 = vmatpush1.msra.mxu0 0.0
  %643 = vmatprep.subr.mxu0 0.0
  %644 = vmatpush1.msra.mxu0 0.0
  %645 = vmatprep.subr.mxu0 0.0
  %646 = vmatpush1.msra.mxu0 0.0
  %647 = vmatprep.subr.mxu0 0.0
  %648 = vmatpush1.msra.mxu0 0.0
  %649 = vmatprep.subr.mxu0 0.0
  %650 = vmatpush1.msra.mxu0 0.0
  %651 = vmatprep.subr.mxu0 0.0
  %652 = vmatpush1.msra.mxu0 0.0
  %653 = vmatprep.subr.mxu0 0.0
  %654 = vmatpush1.msra.mxu0 0.0
  %655 = vmatprep.subr.mxu0 0.0
  %656 = vmatpush1.msra.mxu0 0.0
  %657 = vmatprep.subr.mxu0 0.0
  %658 = vmatpush1.msra.mxu0 %v122
  %659 = vmatprep.subr.mxu0 0.0
  %660 = vmatpush1.msra.mxu0 %v121
  %661 = vmatprep.subr.mxu0 0.0
  %662 = vmatpush1.msra.mxu0 %v120
  %663 = vmatprep.subr.mxu0 0.0
  %664 = vmatpush1.msra.mxu0 %v119
  %665 = vmatprep.subr.mxu0 0.0
  %666 = vmatpush2.msra.mxu0 0.0
  %667 = vmatprep.subr.mxu0 0.0
  %668 = vmatpush2.msra.mxu0 0.0
  %669 = vmatprep.subr.mxu0 0.0
  %670 = vmatpush2.msra.mxu0 0.0
  %671 = vmatprep.subr.mxu0 0.0
  %672 = vmatpush2.msra.mxu0 0.0
  %673 = vmatprep.subr.mxu0 0.0
  %674 = vmatpush2.msra.mxu0 0.0
  %675 = vmatprep.subr.mxu0 0.0
  %676 = vmatpush2.msra.mxu0 0.0
  %677 = vmatprep.subr.mxu0 0.0
  %678 = vmatpush2.msra.mxu0 0.0
  %679 = vmatprep.subr.mxu0 0.0
  %680 = vmatpush2.msra.mxu0 0.0
  %681 = vmatprep.subr.mxu0 0.0
  %682 = vmatpush2.msra.mxu0 0.0
  %683 = vmatprep.subr.mxu0 0.0
  %684 = vmatpush2.msra.mxu0 0.0
  %685 = vmatprep.subr.mxu0 0.0
  %686 = vmatpush2.msra.mxu0 0.0
  %687 = vmatprep.subr.mxu0 0.0
  %688 = vmatpush2.msra.mxu0 0.0
  %689 = vmatprep.subr.mxu0 0.0
  %690 = vmatpush2.msra.mxu0 0.0
  %691 = vmatprep.subr.mxu0 0.0
  %692 = vmatpush2.msra.mxu0 0.0
  %693 = vmatprep.subr.mxu0 0.0
  %694 = vmatpush2.msra.mxu0 0.0
  %695 = vmatprep.subr.mxu0 0.0
  %696 = vmatpush2.msra.mxu0 0.0
  %697 = vmatprep.mubr.f32.mxu0 0.0
  %698 = vmatmul.mubr.f32.gmra.mxu0 %v631
  %v699 = vpop.f32.mrf.mxu0
  %v700 = vadd.f32 0.0, %v699
  %v701 = vpop.f32.mrf.mxu0
  %702 = vdwg.mxu0
  %v703 = vadd.f32 %v627, %v700
  %v704 = vxor.u32 %v703, 2147483648
  %v705 = vmul.f32 %v704, 1.442695
  %v706 = vpow.pop %v705
  %v707 = vadd.f32 %v706, 1.0
  %v708 = vrcp.pop %v707
  %v709 = vmul.f32 1.0, %v708
  %v710 = vtanh.pop %v703
  %v711 = vmul.f32 %v709, %v620
  %713 = vrot.lane.b32.xlu0 %v710, 64
  %v714 = vpop.permute.xlu0 %713
  %v716 = vmul.f32 %v709, %v714
  %718 = vrot.lane.b32.xlu0 %v716, 32
  %v719 = vpop.permute.xlu0 %718
  %v721 = vadd.f32 %v711, %v719
  %v722 = vtanh.pop %v721
  %724 = vrot.lane.b32.xlu0 %v722, 64
  %v725 = vpop.permute.xlu0 %724
  %v727 = vmul.f32 %v709, %v725
  %v728 = vld [vmem:[#allocation2 + $0xc] sm:$0x3]
  %730 = vrot.lane.b32.xlu0 %v727, 32
  %v731 = vpop.permute.xlu0 %730
  %v732 = vsel %vm124, %v731, 0
  %734 = vmatprep.subr.mxu0 0.0
  %735 = vmatpush1.msra.mxu0 0.0
  %736 = vmatprep.subr.mxu0 0.0
  %737 = vmatpush1.msra.mxu0 0.0
  %738 = vmatprep.subr.mxu0 0.0
  %739 = vmatpush1.msra.mxu0 0.0
  %740 = vmatprep.subr.mxu0 0.0
  %741 = vmatpush1.msra.mxu0 0.0
  %742 = vmatprep.subr.mxu0 0.0
  %743 = vmatpush1.msra.mxu0 0.0
  %744 = vmatprep.subr.mxu0 0.0
  %745 = vmatpush1.msra.mxu0 0.0
  %746 = vmatprep.subr.mxu0 0.0
  %747 = vmatpush1.msra.mxu0 0.0
  %748 = vmatprep.subr.mxu0 0.0
  %749 = vmatpush1.msra.mxu0 0.0
  %750 = vmatprep.subr.mxu0 0.0
  %751 = vmatpush1.msra.mxu0 0.0
  %752 = vmatprep.subr.mxu0 0.0
  %753 = vmatpush1.msra.mxu0 0.0
  %754 = vmatprep.subr.mxu0 0.0
  %755 = vmatpush1.msra.mxu0 0.0
  %756 = vmatprep.subr.mxu0 0.0
  %757 = vmatpush1.msra.mxu0 0.0
  %758 = vmatprep.subr.mxu0 0.0
  %759 = vmatpush1.msra.mxu0 %v122
  %760 = vmatprep.subr.mxu0 0.0
  %761 = vmatpush1.msra.mxu0 %v121
  %762 = vmatprep.subr.mxu0 0.0
  %763 = vmatpush1.msra.mxu0 %v120
  %764 = vmatprep.subr.mxu0 0.0
  %765 = vmatpush1.msra.mxu0 %v119
  %766 = vmatprep.subr.mxu0 0.0
  %767 = vmatpush2.msra.mxu0 0.0
  %768 = vmatprep.subr.mxu0 0.0
  %769 = vmatpush2.msra.mxu0 0.0
  %770 = vmatprep.subr.mxu0 0.0
  %771 = vmatpush2.msra.mxu0 0.0
  %772 = vmatprep.subr.mxu0 0.0
  %773 = vmatpush2.msra.mxu0 0.0
  %774 = vmatprep.subr.mxu0 0.0
  %775 = vmatpush2.msra.mxu0 0.0
  %776 = vmatprep.subr.mxu0 0.0
  %777 = vmatpush2.msra.mxu0 0.0
  %778 = vmatprep.subr.mxu0 0.0
  %779 = vmatpush2.msra.mxu0 0.0
  %780 = vmatprep.subr.mxu0 0.0
  %781 = vmatpush2.msra.mxu0 0.0
  %782 = vmatprep.subr.mxu0 0.0
  %783 = vmatpush2.msra.mxu0 0.0
  %784 = vmatprep.subr.mxu0 0.0
  %785 = vmatpush2.msra.mxu0 0.0
  %786 = vmatprep.subr.mxu0 0.0
  %787 = vmatpush2.msra.mxu0 0.0
  %788 = vmatprep.subr.mxu0 0.0
  %789 = vmatpush2.msra.mxu0 0.0
  %790 = vmatprep.subr.mxu0 0.0
  %791 = vmatpush2.msra.mxu0 0.0
  %792 = vmatprep.subr.mxu0 0.0
  %793 = vmatpush2.msra.mxu0 0.0
  %794 = vmatprep.subr.mxu0 0.0
  %795 = vmatpush2.msra.mxu0 0.0
  %796 = vmatprep.subr.mxu0 0.0
  %797 = vmatpush2.msra.mxu0 0.0
  %798 = vmatprep.mubr.f32.mxu0 0.0
  %799 = vmatmul.mubr.f32.gmra.mxu0 %v732
  %v800 = vpop.f32.mrf.mxu0
  %v801 = vadd.f32 0.0, %v800
  %v802 = vpop.f32.mrf.mxu0
  %803 = vdwg.mxu0
  %v804 = vadd.f32 %v728, %v801
  %v805 = vxor.u32 %v804, 2147483648
  %v806 = vmul.f32 %v805, 1.442695
  %v807 = vpow.pop %v806
  %v808 = vadd.f32 %v807, 1.0
  %v809 = vrcp.pop %v808
  %v810 = vmul.f32 1.0, %v809
  %v811 = vtanh.pop %v804
  %v812 = vmul.f32 %v810, %v721
  %814 = vrot.lane.b32.xlu0 %v811, 64
  %v815 = vpop.permute.xlu0 %814
  %v817 = vmul.f32 %v810, %v815
  %819 = vrot.lane.b32.xlu0 %v817, 32
  %v820 = vpop.permute.xlu0 %819
  %v822 = vadd.f32 %v812, %v820
  %v823 = vtanh.pop %v822
  %825 = vrot.lane.b32.xlu0 %v823, 64
  %v826 = vpop.permute.xlu0 %825
  %v828 = vmul.f32 %v810, %v826
  %v829 = vld [vmem:[#allocation2 + $0xe] sm:$0x3]
  %831 = vrot.lane.b32.xlu0 %v828, 32
  %v832 = vpop.permute.xlu0 %831
  %v833 = vsel %vm124, %v832, 0
  %835 = vmatprep.subr.mxu0 0.0
  %836 = vmatpush1.msra.mxu0 0.0
  %837 = vmatprep.subr.mxu0 0.0
  %838 = vmatpush1.msra.mxu0 0.0
  %839 = vmatprep.subr.mxu0 0.0
  %840 = vmatpush1.msra.mxu0 0.0
  %841 = vmatprep.subr.mxu0 0.0
  %842 = vmatpush1.msra.mxu0 0.0
  %843 = vmatprep.subr.mxu0 0.0
  %844 = vmatpush1.msra.mxu0 0.0
  %845 = vmatprep.subr.mxu0 0.0
  %846 = vmatpush1.msra.mxu0 0.0
  %847 = vmatprep.subr.mxu0 0.0
  %848 = vmatpush1.msra.mxu0 0.0
  %849 = vmatprep.subr.mxu0 0.0
  %850 = vmatpush1.msra.mxu0 0.0
  %851 = vmatprep.subr.mxu0 0.0
  %852 = vmatpush1.msra.mxu0 0.0
  %853 = vmatprep.subr.mxu0 0.0
  %854 = vmatpush1.msra.mxu0 0.0
  %855 = vmatprep.subr.mxu0 0.0
  %856 = vmatpush1.msra.mxu0 0.0
  %857 = vmatprep.subr.mxu0 0.0
  %858 = vmatpush1.msra.mxu0 0.0
  %859 = vmatprep.subr.mxu0 0.0
  %860 = vmatpush1.msra.mxu0 %v122
  %861 = vmatprep.subr.mxu0 0.0
  %862 = vmatpush1.msra.mxu0 %v121
  %863 = vmatprep.subr.mxu0 0.0
  %864 = vmatpush1.msra.mxu0 %v120
  %865 = vmatprep.subr.mxu0 0.0
  %866 = vmatpush1.msra.mxu0 %v119
  %867 = vmatprep.subr.mxu0 0.0
  %868 = vmatpush2.msra.mxu0 0.0
  %869 = vmatprep.subr.mxu0 0.0
  %870 = vmatpush2.msra.mxu0 0.0
  %871 = vmatprep.subr.mxu0 0.0
  %872 = vmatpush2.msra.mxu0 0.0
  %873 = vmatprep.subr.mxu0 0.0
  %874 = vmatpush2.msra.mxu0 0.0
  %875 = vmatprep.subr.mxu0 0.0
  %876 = vmatpush2.msra.mxu0 0.0
  %877 = vmatprep.subr.mxu0 0.0
  %878 = vmatpush2.msra.mxu0 0.0
  %879 = vmatprep.subr.mxu0 0.0
  %880 = vmatpush2.msra.mxu0 0.0
  %881 = vmatprep.subr.mxu0 0.0
  %882 = vmatpush2.msra.mxu0 0.0
  %883 = vmatprep.subr.mxu0 0.0
  %884 = vmatpush2.msra.mxu0 0.0
  %885 = vmatprep.subr.mxu0 0.0
  %886 = vmatpush2.msra.mxu0 0.0
  %887 = vmatprep.subr.mxu0 0.0
  %888 = vmatpush2.msra.mxu0 0.0
  %889 = vmatprep.subr.mxu0 0.0
  %890 = vmatpush2.msra.mxu0 0.0
  %891 = vmatprep.subr.mxu0 0.0
  %892 = vmatpush2.msra.mxu0 0.0
  %893 = vmatprep.subr.mxu0 0.0
  %894 = vmatpush2.msra.mxu0 0.0
  %895 = vmatprep.subr.mxu0 0.0
  %896 = vmatpush2.msra.mxu0 0.0
  %897 = vmatprep.subr.mxu0 0.0
  %898 = vmatpush2.msra.mxu0 0.0
  %899 = vmatprep.mubr.f32.mxu0 0.0
  %900 = vmatmul.mubr.f32.gmra.mxu0 %v833
  %v901 = vpop.f32.mrf.mxu0
  %v902 = vadd.f32 0.0, %v901
  %v903 = vpop.f32.mrf.mxu0
  %904 = vdwg.mxu0
  %v905 = vadd.f32 %v829, %v902
  %v906 = vxor.u32 %v905, 2147483648
  %v907 = vmul.f32 %v906, 1.442695
  %v908 = vpow.pop %v907
  %v909 = vadd.f32 %v908, 1.0
  %v910 = vrcp.pop %v909
  %v911 = vmul.f32 1.0, %v910
  %v912 = vtanh.pop %v905
  %v913 = vmul.f32 %v911, %v822
  %915 = vrot.lane.b32.xlu0 %v912, 64
  %v916 = vpop.permute.xlu0 %915
  %v918 = vmul.f32 %v911, %v916
  %920 = vrot.lane.b32.xlu0 %v918, 32
  %v921 = vpop.permute.xlu0 %920
  %v923 = vadd.f32 %v913, %v921
  %v924 = vtanh.pop %v923
  %926 = vrot.lane.b32.xlu0 %v924, 64
  %v927 = vpop.permute.xlu0 %926
  %v929 = vmul.f32 %v911, %v927
  %v930 = vld [vmem:[%s4] sm:$0xff]
  %v931 = vld [vmem:[%s4 + $0x8] sm:$0xff]
  %v932 = vld [vmem:[%s4 + $0x10] sm:$0xff]
  %v933 = vld [vmem:[%s4 + $0x18] sm:$0xff]
  %v934 = vld [vmem:[#allocation3] sm:$0x1]
  %v936 = vlaneseq
  %v937 = vshrl.u32 %v936, 7
  %v938 = vsub.s32 0, %v937
  %v939 = vrot.slane %v934, %v938
  %942 = vrot.lane.b32.xlu0 %v929, 32
  %v943 = vpop.permute.xlu0 %942
  %v944 = vsel %vm124, %v943, 0
  %946 = vmatprep.subr.mxu0 0.0
  %947 = vmatpush1.msra.mxu0 0.0
  %948 = vmatprep.subr.mxu0 0.0
  %949 = vmatpush1.msra.mxu0 0.0
  %950 = vmatprep.subr.mxu0 0.0
  %951 = vmatpush1.msra.mxu0 0.0
  %952 = vmatprep.subr.mxu0 0.0
  %953 = vmatpush1.msra.mxu0 0.0
  %954 = vmatprep.subr.mxu0 0.0
  %955 = vmatpush1.msra.mxu0 0.0
  %956 = vmatprep.subr.mxu0 0.0
  %957 = vmatpush1.msra.mxu0 0.0
  %958 = vmatprep.subr.mxu0 0.0
  %959 = vmatpush1.msra.mxu0 0.0
  %960 = vmatprep.subr.mxu0 0.0
  %961 = vmatpush1.msra.mxu0 0.0
  %962 = vmatprep.subr.mxu0 0.0
  %963 = vmatpush1.msra.mxu0 0.0
  %964 = vmatprep.subr.mxu0 0.0
  %965 = vmatpush1.msra.mxu0 0.0
  %966 = vmatprep.subr.mxu0 0.0
  %967 = vmatpush1.msra.mxu0 0.0
  %968 = vmatprep.subr.mxu0 0.0
  %969 = vmatpush1.msra.mxu0 0.0
  %970 = vmatprep.subr.mxu0 0.0
  %971 = vmatpush1.msra.mxu0 %v933
  %972 = vmatprep.subr.mxu0 0.0
  %973 = vmatpush1.msra.mxu0 %v932
  %974 = vmatprep.subr.mxu0 0.0
  %975 = vmatpush1.msra.mxu0 %v931
  %976 = vmatprep.subr.mxu0 0.0
  %977 = vmatpush1.msra.mxu0 %v930
  %978 = vmatprep.subr.mxu0 0.0
  %979 = vmatpush2.msra.mxu0 0.0
  %980 = vmatprep.subr.mxu0 0.0
  %981 = vmatpush2.msra.mxu0 0.0
  %982 = vmatprep.subr.mxu0 0.0
  %983 = vmatpush2.msra.mxu0 0.0
  %984 = vmatprep.subr.mxu0 0.0
  %985 = vmatpush2.msra.mxu0 0.0
  %986 = vmatprep.subr.mxu0 0.0
  %987 = vmatpush2.msra.mxu0 0.0
  %988 = vmatprep.subr.mxu0 0.0
  %989 = vmatpush2.msra.mxu0 0.0
  %990 = vmatprep.subr.mxu0 0.0
  %991 = vmatpush2.msra.mxu0 0.0
  %992 = vmatprep.subr.mxu0 0.0
  %993 = vmatpush2.msra.mxu0 0.0
  %994 = vmatprep.subr.mxu0 0.0
  %995 = vmatpush2.msra.mxu0 0.0
  %996 = vmatprep.subr.mxu0 0.0
  %997 = vmatpush2.msra.mxu0 0.0
  %998 = vmatprep.subr.mxu0 0.0
  %999 = vmatpush2.msra.mxu0 0.0
  %1000 = vmatprep.subr.mxu0 0.0
  %1001 = vmatpush2.msra.mxu0 0.0
  %1002 = vmatprep.subr.mxu0 0.0
  %1003 = vmatpush2.msra.mxu0 0.0
  %1004 = vmatprep.subr.mxu0 0.0
  %1005 = vmatpush2.msra.mxu0 0.0
  %1006 = vmatprep.subr.mxu0 0.0
  %1007 = vmatpush2.msra.mxu0 0.0
  %1008 = vmatprep.subr.mxu0 0.0
  %1009 = vmatpush2.msra.mxu0 0.0
  %1010 = vmatprep.mubr.f32.mxu0 0.0
  %1011 = vmatmul.mubr.f32.gmra.mxu0 %v944
  %v1012 = vpop.f32.mrf.mxu0
  %v1013 = vadd.f32 %v939, %v1012
  %v1014 = vpop.f32.mrf.mxu0
  %1015 = vdwg.mxu0
  %vm1016 = vcmask 1024
  %1017 = vst.msk [vmem:[%s6] sm:$0x3] %vm1016, %v1013
  // Predicated region
  $region26: #{tpu_custom_call.1} parent=0 // pred_check
    _
  $region27: #{tpu_custom_call.1} parent=0 // pred_check_branch
    %1019 = sbr.rel (0) target = $region29
  $region28: #{tpu_custom_call.1} parent=0 // pred_region
    _
  $region29: #{tpu_custom_call.1} parent=0 // pred_fallthru
    _
  // Predicated region
  $region30: #{tpu_custom_call.1} parent=0 // pred_check
    _
  $region31: #{tpu_custom_call.1} parent=0 // pred_check_branch
    %1021 = sbr.rel (0) target = $region33
  $region32: #{tpu_custom_call.1} parent=0 // pred_region
    _
  $region33: #{tpu_custom_call.1} parent=0 // pred_fallthru
    _

</llo_original>
